<compile_context>
chip_gen: v7x
topology: tpu7x:2x2x1
jax: 0.10.0
libtpu: 0.0.40
codegen_flags: <defaults>
</compile_context>

<pallas_src>
import functools

import jax
import jax.numpy as jnp
from jax.experimental import pallas as pl
from jax.experimental.pallas import tpu as pltpu


def _vmem_capacity_bytes():
    try:
        return int(pltpu.get_tpu_info().vmem_capacity_bytes)
    except Exception:
        return 64 << 20  # conservative (v7x per-TC)


def _pick_channel_tile(C, L, itemsize, budget):
    """Channel-tile width TC.  Lane-dense (multiple of 128) whenever C >= 128."""
    per_c = L * max(itemsize, 4)  # bytes per channel column of f32 working set
    if C < 128:
        # Full-C block (equals the array dim -> legal).  Masked lane stores,
        # but relayouting in HBM would cost more than it saves.
        return C
    if C % 128 == 0:
        best, tc = 128, 128
        while tc <= C:
            if C % tc == 0 and tc * per_c <= budget:
                best = tc
            tc += 128
        return best
    # Ragged C: fixed lane-dense tile <= C; Pallas masks the edge block.
    best, tc = 128, 128
    while tc <= C:
        if tc * per_c <= budget:
            best = tc
        tc += 128
    return best


def _pick_batch_tile(B, L, TC, itemsize, budget, NC):
    """Fold batch rows per block until the I/O tile reaches the budget, while
    keeping >= 2 total grid steps when possible (v7x has 2 TensorCores)."""
    per_row = L * TC * max(itemsize, 4)
    divisors = [d for d in range(1, B + 1) if B % d == 0]
    tb = 1
    for d in divisors:
        if d * per_row <= budget:
            tb = d
    while tb > 1 and (B // tb) * NC < 2:
        smaller = [d for d in divisors if d < tb]
        tb = smaller[-1] if smaller else 1
    return tb


def _decomp_kernel(kernel_size, pad, use_cumsum, x_ref, res_ref, mean_ref):
    # x_ref / res_ref / mean_ref: (TB, L, TC).
    TB, L, TC = x_ref.shape
    x = x_ref[...]  # native dtype; stays resident

    # Replicate padding along time, built as a value (no scratch Ref traffic).
    if pad > 0:
        front = jnp.broadcast_to(x[:, 0:1, :], (TB, pad, TC))
        back = jnp.broadcast_to(x[:, L - 1:L, :], (TB, pad, TC))
        xpad = jnp.concatenate([front, x, back], axis=1)
    else:
        xpad = x
    Lp = L + 2 * pad

    if use_cumsum:
        # O(1)-per-element window sum via inclusive cumsum (log-depth doubling)
        # and a static-slice difference: sum[t..t+k-1] = C[t+k-1] - C[t-1].
        c = xpad.astype(jnp.float32)
        shift = 1
        while shift < Lp:
            z = jnp.zeros((TB, shift, TC), jnp.float32)
            c = c + jnp.concatenate([z, c[:, :Lp - shift, :]], axis=1)
            shift *= 2
        upper = c[:, kernel_size - 1:kernel_size - 1 + L, :]
        if L > 1:
            lower = jnp.concatenate(
                [jnp.zeros((TB, 1, TC), jnp.float32), c[:, :L - 1, :]], axis=1)
        else:
            lower = jnp.zeros((TB, 1, TC), jnp.float32)
        mean = (upper - lower) * (1.0 / kernel_size)
    else:
        # Unrolled shift-and-add over the compile-time constant kernel_size,
        # accumulated in f32 (upcast only inside the accumulate).
        acc = xpad[:, 0:L, :].astype(jnp.float32)
        for j in range(1, kernel_size):
            acc = acc + xpad[:, j:j + L, :].astype(jnp.float32)
        mean = acc * (1.0 / kernel_size)

    mean_ref[...] = mean.astype(mean_ref.dtype)
    res_ref[...] = (x.astype(jnp.float32) - mean).astype(res_ref.dtype)


def series_decomp(x, kernel_size):
    """x: (B, L, C). Returns (res, moving_mean), both (B, L, C)."""
    assert kernel_size >= 1 and kernel_size % 2 == 1, \
        "use an odd kernel_size so output length matches input"
    B, L, C = x.shape
    pad = (kernel_size - 1) // 2
    itemsize = jnp.dtype(x.dtype).itemsize

    cap = _vmem_capacity_bytes()
    # Bigger tiles on 128 MiB-VMEM parts (v5e/v6e); tighter on v7x (64 MiB).
    budget = (4 << 20) if cap >= (96 << 20) else (2 << 20)

    TC = _pick_channel_tile(C, L, itemsize, budget)
    NC = pl.cdiv(C, TC)
    TB = _pick_batch_tile(B, L, TC, itemsize, budget, NC)
    NB = B // TB

    # VMEM estimate: double-buffered 1 input + 2 outputs, plus f32 temporaries.
    io_tile = TB * L * TC * itemsize
    work = TB * (L + 2 * pad) * TC * max(itemsize, 4) + TB * L * TC * 4
    need = 2 * 3 * io_tile + work

    cp_kwargs = dict(dimension_semantics=("parallel", "parallel"))
    if need > (12 << 20):  # approaching v5e's 16 MiB scoped-VMEM default
        cp_kwargs["vmem_limit_bytes"] = int(min(need + (8 << 20), (cap * 3) // 4))

    use_cumsum = kernel_size >= 16
    kernel = functools.partial(_decomp_kernel, kernel_size, pad, use_cumsum)

    cost = pl.CostEstimate(
        flops=int((8 if use_cumsum else 2 * kernel_size) * B * L * C),
        transcendentals=0,
        bytes_accessed=int(3 * B * L * C * itemsize),
    )

    res, mean = pl.pallas_call(
        kernel,
        out_shape=(
            jax.ShapeDtypeStruct((B, L, C), x.dtype),
            jax.ShapeDtypeStruct((B, L, C), x.dtype),
        ),
        grid_spec=pltpu.PrefetchScalarGridSpec(
            num_scalar_prefetch=0,
            grid=(NB, NC),
            in_specs=[
                pl.BlockSpec((TB, L, TC), lambda b, c: (b, 0, c)),
            ],
            out_specs=[
                pl.BlockSpec((TB, L, TC), lambda b, c: (b, 0, c)),
                pl.BlockSpec((TB, L, TC), lambda b, c: (b, 0, c)),
            ],
        ),
        compiler_params=pltpu.CompilerParams(**cp_kwargs),
        cost_estimate=cost,
    )(x)
    return res, mean


def _reference(x, kernel_size):
    pad = (kernel_size - 1) // 2
    front = jnp.repeat(x[:, 0:1, :], pad, axis=1)
    end = jnp.repeat(x[:, -1:, :], pad, axis=1)
    xpad = jnp.concatenate([front, x, end], axis=1)
    L = x.shape[1]
    windows = jnp.stack([xpad[:, j:j + L, :] for j in range(kernel_size)], axis=0)
    mean = jnp.mean(windows.astype(jnp.float32), axis=0).astype(x.dtype)
    return x - mean, mean


if __name__ == "__main__":
    keys = jax.random.split(jax.random.PRNGKey(0), 4)

    # Case 1: small channel count (C < 128 -> full-C block, batch-folded grid).
    B, L, C, k = 2, 16, 8, 5
    x = jax.random.normal(keys[0], (B, L, C), dtype=jnp.float32)
    res, mean = series_decomp(x, k)
    jax.block_until_ready((res, mean))
    res_r, mean_r = _reference(x, k)
    assert res.shape == (B, L, C) and mean.shape == (B, L, C)
    assert jnp.allclose(mean, mean_r, atol=1e-5), "mean mismatch (case 1)"
    assert jnp.allclose(res, res_r, atol=1e-5), "res mismatch (case 1)"

    # Case 2: lane-dense single channel block (C=384 -> TC=384, one block).
    B2, L2, C2, k2 = 2, 24, 384, 7
    x2 = jax.random.normal(keys[1], (B2, L2, C2), dtype=jnp.float32)
    res2, mean2 = series_decomp(x2, k2)
    jax.block_until_ready((res2, mean2))
    res2_r, mean2_r = _reference(x2, k2)
    assert jnp.allclose(mean2, mean2_r, atol=1e-5), "mean mismatch (case 2)"
    assert jnp.allclose(res2, res2_r, atol=1e-5), "res mismatch (case 2)"

    # Case 3: large kernel_size -> cumsum-diff reduction path.
    B3, L3, C3, k3 = 2, 96, 128, 25
    x3 = jax.random.normal(keys[2], (B3, L3, C3), dtype=jnp.float32)
    res3, mean3 = series_decomp(x3, k3)
    jax.block_until_ready((res3, mean3))
    res3_r, mean3_r = _reference(x3, k3)
    assert jnp.allclose(mean3, mean3_r, atol=1e-4), "mean mismatch (case 3)"
    assert jnp.allclose(res3, res3_r, atol=1e-4), "res mismatch (case 3)"

    # Case 4: ragged channel count (C=160 -> TC=128, masked edge block).
    B4, L4, C4, k4 = 2, 16, 160, 5
    x4 = jax.random.normal(keys[3], (B4, L4, C4), dtype=jnp.float32)
    res4, mean4 = series_decomp(x4, k4)
    jax.block_until_ready((res4, mean4))
    res4_r, mean4_r = _reference(x4, k4)
    assert jnp.allclose(mean4, mean4_r, atol=1e-5), "mean mismatch (case 4)"
    assert jnp.allclose(res4, res4_r, atol=1e-5), "res mismatch (case 4)"

    print("KERNEL_OK")
</pallas_src>

<mosaic_0001>
module attributes {stable_mosaic.version = 11 : i64} {
  func.func @_decomp_kernel(%arg0: i32, %arg1: i32, %arg2: memref<1x16x8xf32, #tpu.memory_space<vmem>>, %arg3: memref<1x16x8xf32, #tpu.memory_space<vmem>>, %arg4: memref<1x16x8xf32, #tpu.memory_space<vmem>>) attributes {dimension_semantics = [#tpu.dimension_semantics<parallel>, #tpu.dimension_semantics<parallel>], iteration_bounds = array<i64: 2, 1>, scalar_prefetch = 0 : i64, scratch_operands = 0 : i64, tpu.core_type = #tpu.core_type<tc>, window_params = [{transform_indices = @transform_0, window_bounds = array<i64: 1, 16, 8>}, {transform_indices = @transform_1, window_bounds = array<i64: 1, 16, 8>}, {transform_indices = @transform_2, window_bounds = array<i64: 1, 16, 8>}]} {
    %c0 = arith.constant 0 : index
    %c0_0 = arith.constant 0 : index
    %c0_1 = arith.constant 0 : index
    %0 = vector.load %arg2[%c0, %c0_0, %c0_1] : memref<1x16x8xf32, #tpu.memory_space<vmem>>, vector<1x16x8xf32>
    %1 = vector.extract_strided_slice %0 {offsets = [0, 0, 0], sizes = [1, 1, 8], strides = [1, 1, 1]} : vector<1x16x8xf32> to vector<1x1x8xf32>
    %2 = vector.shape_cast %1 : vector<1x1x8xf32> to vector<1x1x8xf32>
    %3 = vector.broadcast %2 : vector<1x1x8xf32> to vector<1x2x8xf32>
    %4 = vector.extract_strided_slice %0 {offsets = [0, 15, 0], sizes = [1, 1, 8], strides = [1, 1, 1]} : vector<1x16x8xf32> to vector<1x1x8xf32>
    %5 = vector.shape_cast %4 : vector<1x1x8xf32> to vector<1x1x8xf32>
    %6 = vector.broadcast %5 : vector<1x1x8xf32> to vector<1x2x8xf32>
    %7 = tpu.concatenate %3, %0, %6 in 1 : vector<1x2x8xf32>, vector<1x16x8xf32>, vector<1x2x8xf32> -> vector<1x20x8xf32>
    %8 = vector.extract_strided_slice %7 {offsets = [0, 0, 0], sizes = [1, 16, 8], strides = [1, 1, 1]} : vector<1x20x8xf32> to vector<1x16x8xf32>
    %9 = vector.extract_strided_slice %7 {offsets = [0, 1, 0], sizes = [1, 16, 8], strides = [1, 1, 1]} : vector<1x20x8xf32> to vector<1x16x8xf32>
    %10 = arith.addf %8, %9 : vector<1x16x8xf32>
    %11 = vector.extract_strided_slice %7 {offsets = [0, 2, 0], sizes = [1, 16, 8], strides = [1, 1, 1]} : vector<1x20x8xf32> to vector<1x16x8xf32>
    %12 = arith.addf %10, %11 : vector<1x16x8xf32>
    %13 = vector.extract_strided_slice %7 {offsets = [0, 3, 0], sizes = [1, 16, 8], strides = [1, 1, 1]} : vector<1x20x8xf32> to vector<1x16x8xf32>
    %14 = arith.addf %12, %13 : vector<1x16x8xf32>
    %15 = vector.extract_strided_slice %7 {offsets = [0, 4, 0], sizes = [1, 16, 8], strides = [1, 1, 1]} : vector<1x20x8xf32> to vector<1x16x8xf32>
    %16 = arith.addf %14, %15 : vector<1x16x8xf32>
    %cst = arith.constant 2.000000e-01 : f32
    %17 = vector.broadcast %cst : f32 to vector<1x16x8xf32>
    %18 = arith.mulf %16, %17 : vector<1x16x8xf32>
    %c0_2 = arith.constant 0 : index
    %c0_3 = arith.constant 0 : index
    %c0_4 = arith.constant 0 : index
    %19 = vector.load %arg4[%c0_2, %c0_3, %c0_4] : memref<1x16x8xf32, #tpu.memory_space<vmem>>, vector<1x16x8xf32>
    tpu.vector_store %arg4[%c0_2, %c0_3, %c0_4], %18 {strides = array<i32>} : memref<1x16x8xf32, #tpu.memory_space<vmem>>, vector<1x16x8xf32>,
    %20 = arith.subf %0, %18 : vector<1x16x8xf32>
    %c0_5 = arith.constant 0 : index
    %c0_6 = arith.constant 0 : index
    %c0_7 = arith.constant 0 : index
    %21 = vector.load %arg3[%c0_5, %c0_6, %c0_7] : memref<1x16x8xf32, #tpu.memory_space<vmem>>, vector<1x16x8xf32>
    tpu.vector_store %arg3[%c0_5, %c0_6, %c0_7], %20 {strides = array<i32>} : memref<1x16x8xf32, #tpu.memory_space<vmem>>, vector<1x16x8xf32>,
    return
  }
  func.func @transform_0(%arg0: i32, %arg1: i32) -> (i32, i32, i32) {
    %c0_i32 = arith.constant 0 : i32
    %c0_i32_0 = arith.constant 0 : i32
    return %arg0, %c0_i32, %arg1 : i32, i32, i32
  }
  func.func @transform_1(%arg0: i32, %arg1: i32) -> (i32, i32, i32) {
    %c0_i32 = arith.constant 0 : i32
    %c0_i32_0 = arith.constant 0 : i32
    return %arg0, %c0_i32, %arg1 : i32, i32, i32
  }
  func.func @transform_2(%arg0: i32, %arg1: i32) -> (i32, i32, i32) {
    %c0_i32 = arith.constant 0 : i32
    %c0_i32_0 = arith.constant 0 : i32
    return %arg0, %c0_i32, %arg1 : i32, i32, i32
  }
}

</mosaic_0001>

<llo_original>
// kernel: tpu_custom_call.1
$region0: #{tpu_custom_call.1}
  #allocation0 [shape = 'u32[]', space=smem, size = 0x4, offset = 0x4, fixed_abs, tag = 'smem constant byte address 0x4 - core index']
  #allocation1 [shape = 'u32[144,128]{1,0:T(1,128)}', space=vmem, size = 0x12000, scoped, tag = 'internal scratch']
  %s0 = inlined_call_operand.vmem [shape: f32[2,16,8], index: 0, kind: input, shape index: {}]
  %s1 = inlined_call_operand.vmem [shape: f32[2,16,8], index: 1, kind: output, shape index: {0}]
  %s2 = inlined_call_operand.vmem [shape: f32[2,16,8], index: 2, kind: output, shape index: {1}]
  %3 = xla_tuple %s1, %s2
  %s4 = sld [smem:[#allocation0]]
  $region45: #{tpu_custom_call.1} parent=0
    _
  %s6 = ssub.s32 1, %s4
  %s7 = scalar_select 0, %s6, %s4
  loop: start=0, step=1, limit=4
  $region2: #{tpu_custom_call.1} parent=0 // loop_pre_header
    _
  $region3: #{tpu_custom_call.1} parent=0 // loop_header
    %s9 = sphi 0, %s13
    %p10 = scmp.ge.s32.totalorder %s9, 4
    %s16 = sphi 0, %s28
    %s17 = sphi 0, %s24
    %s18 = sphi 0, %s16
    %s19 = sphi 0, %s17
    %s20 = sphi 0, %s18
    %s21 = sphi 0, %s19
    %s33 = sphi 0, %s35
    %s36 = sphi 0, %s33
    %s37 = sphi 0, %s36
    %s53 = sphi 0, %s37
    %s61 = sphi 0, %s63
    %s64 = sphi 0, %s61
    %s65 = sphi 0, %s64
    %s81 = sphi 0, %s65
    %s89 = sphi 0, %s91
    %s92 = sphi 0, %s89
    %s93 = sphi 0, %s92
    %s109 = sphi 0, %s93
  $region4: #{tpu_custom_call.1} parent=0 // loop_header_branch
    %12 = sbr.rel (%p10) target = $region8
  $region5: #{tpu_custom_call.1} parent=0 // loop_body
    %s14 = ssub.s32 %s9, 1
    %s15 = ssub.s32 %s9, 2
    %s22 = sadd.s32 1, %s17
    %p23 = scmp.ge.s32.totalorder %s22, 1
    %s24 = scalar_select %p23, 0, %s22
    %s25 = sadd.s32 1, %s16
    %s26 = scalar_select %p23, %s25, %s16
    %p27 = scmp.ge.s32.totalorder %s26, 2
    %s28 = scalar_select %p27, 0, %s26
    %s29 = ssub.s32 %s16, %s28
    %s30 = ssub.s32 %s17, %s24
    %s31 = sor.u32 %s29, %s30
    %p32 = scmp.eq.s32.totalorder %s31, 0
    %s34 = sadd.s32 %s33, 1
    %s35 = scalar_select %p32, %s33, %s34
    %p38 = pneg %p32
    %p39 = scmp.eq.s32.totalorder %s9, 1
    %p40 = por %p38, %p39
    %p41 = scmp.ne.s32.totalorder %s33, %s36
    %p42 = scmp.eq.s32.totalorder %s9, 0
    %p43 = por %p41, %p42
    %p44 = scmp.ne.s32.totalorder %s33, %s36
    %p45 = scmp.eq.s32.totalorder %s14, 1
    %p46 = por %p44, %p45
    %p47 = scmp.ne.s32.totalorder %s36, %s37
    %p48 = scmp.eq.s32.totalorder %s14, 0
    %p49 = por %p47, %p48
    %p50 = scmp.ne.s32.totalorder %s36, %s37
    %p51 = scmp.eq.s32.totalorder %s15, 1
    %p52 = por %p50, %p51
    %p54 = scmp.ne.s32.totalorder %s37, %s53
    %p55 = scmp.eq.s32.totalorder %s15, 0
    %p56 = por %p54, %p55
    %s57 = ssub.s32 %s16, %s28
    %s58 = ssub.s32 %s17, %s24
    %s59 = sor.u32 %s57, %s58
    %p60 = scmp.eq.s32.totalorder %s59, 0
    %s62 = sadd.s32 %s61, 1
    %s63 = scalar_select %p60, %s61, %s62
    %p66 = pneg %p60
    %p67 = scmp.eq.s32.totalorder %s9, 1
    %p68 = por %p66, %p67
    %p69 = scmp.ne.s32.totalorder %s61, %s64
    %p70 = scmp.eq.s32.totalorder %s9, 0
    %p71 = por %p69, %p70
    %p72 = scmp.ne.s32.totalorder %s61, %s64
    %p73 = scmp.eq.s32.totalorder %s14, 1
    %p74 = por %p72, %p73
    %p75 = scmp.ne.s32.totalorder %s64, %s65
    %p76 = scmp.eq.s32.totalorder %s14, 0
    %p77 = por %p75, %p76
    %p78 = scmp.ne.s32.totalorder %s64, %s65
    %p79 = scmp.eq.s32.totalorder %s15, 1
    %p80 = por %p78, %p79
    %p82 = scmp.ne.s32.totalorder %s65, %s81
    %p83 = scmp.eq.s32.totalorder %s15, 0
    %p84 = por %p82, %p83
    %s85 = ssub.s32 %s16, %s28
    %s86 = ssub.s32 %s17, %s24
    %s87 = sor.u32 %s85, %s86
    %p88 = scmp.eq.s32.totalorder %s87, 0
    %s90 = sadd.s32 %s89, 1
    %s91 = scalar_select %p88, %s89, %s90
    %p94 = pneg %p88
    %p95 = scmp.eq.s32.totalorder %s9, 1
    %p96 = por %p94, %p95
    %p97 = scmp.ne.s32.totalorder %s89, %s92
    %p98 = scmp.eq.s32.totalorder %s9, 0
    %p99 = por %p97, %p98
    %p100 = scmp.ne.s32.totalorder %s89, %s92
    %p101 = scmp.eq.s32.totalorder %s14, 1
    %p102 = por %p100, %p101
    %p103 = scmp.ne.s32.totalorder %s92, %s93
    %p104 = scmp.eq.s32.totalorder %s14, 0
    %p105 = por %p103, %p104
    %p106 = scmp.ne.s32.totalorder %s92, %s93
    %p107 = scmp.eq.s32.totalorder %s15, 1
    %p108 = por %p106, %p107
    %p110 = scmp.ne.s32.totalorder %s93, %s109
    %p111 = scmp.eq.s32.totalorder %s15, 0
    %p112 = por %p110, %p111
    %p113 = scmp.le.s32.totalorder 1, %s9
    %p114 = scmp.lt.s32.totalorder %s9, 3
    %p115 = pnand %p113, %p114
    %p116 = pneg %p115
    // Predicated region
    $region9: #{tpu_custom_call.1} parent=5 // pred_check
      _
    $region10: #{tpu_custom_call.1} parent=5 // pred_check_branch
      %118 = sbr.rel (%p115) target = $region12
    $region11: #{tpu_custom_call.1} parent=5 // pred_region
      %s119 = ssub.s32 %s9, 1
    $region12: #{tpu_custom_call.1} parent=5 // pred_fallthru
      _
    %p120 = scmp.lt.s32.totalorder %s9, 2
    // Predicated region
    $region13: #{tpu_custom_call.1} parent=5 // pred_check
      %p121 = pneg %p120
    $region14: #{tpu_custom_call.1} parent=5 // pred_check_branch
      %123 = sbr.rel (%p121) target = $region16
    $region15: #{tpu_custom_call.1} parent=5 // pred_region
      // Predicated region
      $region17: #{tpu_custom_call.1} parent=15 // pred_check
        %p124 = pneg %p43
      $region18: #{tpu_custom_call.1} parent=15 // pred_check_branch
        %126 = sbr.rel (%p124) target = $region20
      $region19: #{tpu_custom_call.1} parent=15 // pred_region
        %p127 = scmp.lt.s32.totalorder %s16, 1
        %s128 = scalar_select %p127, %s16, 1
        %p129 = scmp.lt.s32.totalorder %s17, 0
        %s130 = scalar_select %p129, %s17, 0
        %s131 = smul.addr %s128, 2
        %s132 = sadd.s32 %s130, %s131
        %s133 = smul.addr %s132, 8
        %s134 = scalar_lea.vmem %s0, %s133
      $region20: #{tpu_custom_call.1} parent=15 // pred_fallthru
        _
    $region16: #{tpu_custom_call.1} parent=5 // pred_fallthru
      _
    %p135 = scmp.le.s32.totalorder 1, %s9
    %p136 = scmp.lt.s32.totalorder %s9, 3
    %p137 = pnand %p135, %p136
    %p138 = pneg %p137
    // Predicated region
    $region21: #{tpu_custom_call.1} parent=5 // pred_check
      _
    $region22: #{tpu_custom_call.1} parent=5 // pred_check_branch
      %140 = sbr.rel (%p137) target = $region24
    $region23: #{tpu_custom_call.1} parent=5 // pred_region
      %s141 = ssub.s32 %s9, 1
      %p142 = scmp.lt.s32.totalorder %s18, 1
      %s143 = scalar_select %p142, %s18, 1
      %p144 = scmp.lt.s32.totalorder %s19, 0
      %s145 = scalar_select %p144, %s19, 0
      %s146 = smul.addr %s143, 2
      %s147 = sadd.s32 %s145, %s146
      %s148 = smul.addr %s147, 8
      %s149 = scalar_lea.vmem %s0, %s148
      %p150 = pneg %p49
      %p151 = pneg %p46
      %p152 = pneg %p77
      %p153 = pneg %p74
      %p154 = scmp.lt.s32.totalorder %s18, 1
      %s155 = scalar_select %p154, %s18, 1
      %p156 = scmp.lt.s32.totalorder %s19, 0
      %s157 = scalar_select %p156, %s19, 0
      %s158 = smul.addr %s155, 2
      %s159 = sadd.s32 %s157, %s158
      %s160 = smul.addr %s159, 8
      %s161 = scalar_lea.vmem %s1, %s160
      %p162 = pneg %p105
      %p163 = pneg %p102
      %p164 = scmp.lt.s32.totalorder %s18, 1
      %s165 = scalar_select %p164, %s18, 1
      %p166 = scmp.lt.s32.totalorder %s19, 0
      %s167 = scalar_select %p166, %s19, 0
      %s168 = smul.addr %s165, 2
      %s169 = sadd.s32 %s167, %s168
      %s170 = smul.addr %s169, 8
      %s171 = scalar_lea.vmem %s2, %s170
      %p172 = scmp.lt.s32.totalorder %s18, 1
      %s173 = scalar_select %p172, %s18, 1
      %p174 = scmp.lt.s32.totalorder %s19, 0
      %s175 = scalar_select %p174, %s19, 0
      %s176 = smul.addr %s173, 2
      %s177 = sadd.s32 %s175, %s176
      %s178 = smul.addr %s177, 8
      %s179 = scalar_lea.vmem %s0, %s178
      %p180 = scmp.lt.s32.totalorder %s18, 1
      %s181 = scalar_select %p180, %s18, 1
      %p182 = scmp.lt.s32.totalorder %s19, 0
      %s183 = scalar_select %p182, %s19, 0
      %s184 = smul.addr %s181, 2
      %s185 = sadd.s32 %s183, %s184
      %s186 = smul.addr %s185, 8
      %s187 = scalar_lea.vmem %s1, %s186
      %p188 = scmp.lt.s32.totalorder %s18, 1
      %s189 = scalar_select %p188, %s18, 1
      %p190 = scmp.lt.s32.totalorder %s19, 0
      %s191 = scalar_select %p190, %s19, 0
      %s192 = smul.addr %s189, 2
      %s193 = sadd.s32 %s191, %s192
      %s194 = smul.addr %s193, 8
      %s195 = scalar_lea.vmem %s2, %s194
      %v196 = vld [vmem:[%s179] sm:$0xff]
      %v197 = vld [vmem:[%s179 + $0x8] sm:$0xff]
      %v198 = vlaneseq
      %v199 = vshrl.u32 %v198, 7
      %v200 = vsub.s32 0, %v199
      %v201 = vrot.slane %v196, %v200
      %v202 = vlaneseq
      %v203 = vshrl.u32 %v202, 7
      %v204 = vsub.s32 7, %v203
      %v205 = vrot.slane %v197, %v204
      %vm208 = vcmask 1041408
      %v209 = vrot.slane %v196, 6
      %v210 = vrot.slane %v197, 6
      %v211 = vsel %vm208, %v209, %v210
      %v215 = vsel %vm208, %v201, %v209
      %v216 = vsel %vm208, %v210, %v205
      %vm219 = vcmask 1046528
      %v220 = vrot.slane %v215, 1
      %v221 = vrot.slane %v211, 1
      %v222 = vsel %vm219, %v220, %v221
      %v223 = vrot.slane %v216, 1
      %v224 = vsel %vm219, %v221, %v223
      %v227 = vadd.f32 %v215, %v222
      %v228 = vadd.f32 %v211, %v224
      %vm229 = vcmask 1045504
      %v230 = vrot.slane %v215, 2
      %v231 = vrot.slane %v211, 2
      %v232 = vsel %vm229, %v230, %v231
      %v233 = vrot.slane %v216, 2
      %v234 = vsel %vm229, %v231, %v233
      %v237 = vadd.f32 %v227, %v232
      %v238 = vadd.f32 %v228, %v234
      %vm239 = vcmask 1044480
      %v240 = vrot.slane %v215, 3
      %v241 = vrot.slane %v211, 3
      %v242 = vsel %vm239, %v240, %v241
      %v243 = vrot.slane %v216, 3
      %v244 = vsel %vm239, %v241, %v243
      %v247 = vadd.f32 %v237, %v242
      %v248 = vadd.f32 %v238, %v244
      %vm249 = vcmask 1043456
      %v250 = vrot.slane %v215, 4
      %v251 = vrot.slane %v211, 4
      %v252 = vsel %vm249, %v250, %v251
      %v253 = vrot.slane %v216, 4
      %v254 = vsel %vm249, %v251, %v253
      %v257 = vadd.f32 %v247, %v252
      %v258 = vadd.f32 %v248, %v254
      %v259 = vmul.f32 %v257, 0.2
      %v260 = vmul.f32 %v258, 0.2
      %vm261 = vcmask 64512
      %262 = vst.msk [vmem:[%s195] sm:$0xff] %vm261, %v259
      %263 = vst.msk [vmem:[%s195 + $0x8] sm:$0xff] %vm261, %v260
      %v264 = vsub.f32 %v196, %v259
      %v265 = vsub.f32 %v197, %v260
      %266 = vst.msk [vmem:[%s187] sm:$0xff] %vm261, %v264
      %267 = vst.msk [vmem:[%s187 + $0x8] sm:$0xff] %vm261, %v265
      %p268 = scmp.lt.s32.totalorder %s18, 1
      %s269 = scalar_select %p268, %s18, 1
      %p270 = scmp.lt.s32.totalorder %s19, 0
      %s271 = scalar_select %p270, %s19, 0
      %s272 = smul.addr %s269, 2
      %s273 = sadd.s32 %s271, %s272
      %s274 = smul.addr %s273, 8
      %s275 = scalar_lea.vmem %s1, %s274
      %p276 = scmp.lt.s32.totalorder %s18, 1
      %s277 = scalar_select %p276, %s18, 1
      %p278 = scmp.lt.s32.totalorder %s19, 0
      %s279 = scalar_select %p278, %s19, 0
      %s280 = smul.addr %s277, 2
      %s281 = sadd.s32 %s279, %s280
      %s282 = smul.addr %s281, 8
      %s283 = scalar_lea.vmem %s2, %s282
      // Predicated region
      $region25: #{tpu_custom_call.1} parent=23 // pred_check
        %p284 = pneg %p74
      $region26: #{tpu_custom_call.1} parent=23 // pred_check_branch
        %286 = sbr.rel (%p284) target = $region28
      $region27: #{tpu_custom_call.1} parent=23 // pred_region
        _
      $region28: #{tpu_custom_call.1} parent=23 // pred_fallthru
        _
      // Predicated region
      $region29: #{tpu_custom_call.1} parent=23 // pred_check
        %p287 = pneg %p102
      $region30: #{tpu_custom_call.1} parent=23 // pred_check_branch
        %289 = sbr.rel (%p287) target = $region32
      $region31: #{tpu_custom_call.1} parent=23 // pred_region
        _
      $region32: #{tpu_custom_call.1} parent=23 // pred_fallthru
        _
    $region24: #{tpu_custom_call.1} parent=5 // pred_fallthru
      _
    %p290 = scmp.le.s32.totalorder 2, %s9
    // Predicated region
    $region33: #{tpu_custom_call.1} parent=5 // pred_check
      %p291 = pneg %p290
    $region34: #{tpu_custom_call.1} parent=5 // pred_check_branch
      %293 = sbr.rel (%p291) target = $region36
    $region35: #{tpu_custom_call.1} parent=5 // pred_region
      %s294 = ssub.s32 %s9, 2
      // Predicated region
      $region37: #{tpu_custom_call.1} parent=35 // pred_check
        %p295 = pneg %p80
      $region38: #{tpu_custom_call.1} parent=35 // pred_check_branch
        %297 = sbr.rel (%p295) target = $region40
      $region39: #{tpu_custom_call.1} parent=35 // pred_region
        %p298 = scmp.lt.s32.totalorder %s20, 1
        %s299 = scalar_select %p298, %s20, 1
        %p300 = scmp.lt.s32.totalorder %s21, 0
        %s301 = scalar_select %p300, %s21, 0
        %s302 = smul.addr %s299, 2
        %s303 = sadd.s32 %s301, %s302
        %s304 = smul.addr %s303, 8
        %s305 = scalar_lea.vmem %s1, %s304
      $region40: #{tpu_custom_call.1} parent=35 // pred_fallthru
        _
      // Predicated region
      $region41: #{tpu_custom_call.1} parent=35 // pred_check
        %p306 = pneg %p108
      $region42: #{tpu_custom_call.1} parent=35 // pred_check_branch
        %308 = sbr.rel (%p306) target = $region44
      $region43: #{tpu_custom_call.1} parent=35 // pred_region
        %p309 = scmp.lt.s32.totalorder %s20, 1
        %s310 = scalar_select %p309, %s20, 1
        %p311 = scmp.lt.s32.totalorder %s21, 0
        %s312 = scalar_select %p311, %s21, 0
        %s313 = smul.addr %s310, 2
        %s314 = sadd.s32 %s312, %s313
        %s315 = smul.addr %s314, 8
        %s316 = scalar_lea.vmem %s2, %s315
      $region44: #{tpu_custom_call.1} parent=35 // pred_fallthru
        _
    $region36: #{tpu_custom_call.1} parent=5 // pred_fallthru
      _
  $region6: #{tpu_custom_call.1} parent=0 // loop_footer
    %s13 = sadd.s32 1, %s9
  $region7: #{tpu_custom_call.1} parent=0 // loop_footer_branch
    %8 = sbr.rel target = $region3
  $region8: #{tpu_custom_call.1} parent=0 // loop_exit
    _

</llo_original>
